<compile_context>
chip_gen: v7x
topology: tpu7x:2x2x1
jax: 0.10.0
libtpu: 0.0.40
codegen_flags: <defaults>
</compile_context>

<pallas_src>
import functools

import jax
import jax.numpy as jnp
from jax.experimental import pallas as pl
from jax.experimental.pallas import tpu as pltpu


_NEG_BIG = -1e30  # padded-logit bias: exp(_NEG_BIG - m) == 0 in f32


def _inverse_net_kernel(prev_ref, next_ref, w1p_ref, w1n_ref, b1_ref,
                        w2_ref, b2_ref, o_ref, *, use_softmax):
    cdt = w1p_ref.dtype  # compute dtype of the MXU operands (bf16)

    # Hidden layer: two K=S dots (prev/next halves of W1) accumulated in f32,
    # f32 bias add, ReLU.  Activations are cast to bf16 here (not in the
    # wrapper) so HBM only ever sees the original f32 tensors once.
    h = jnp.dot(prev_ref[...].astype(cdt), w1p_ref[...],
                preferred_element_type=jnp.float32)
    h = h + jnp.dot(next_ref[...].astype(cdt), w1n_ref[...],
                    preferred_element_type=jnp.float32)
    h = jnp.maximum(h + b1_ref[...], 0.0)

    # Output layer over the lane-dense, padded action axis (A_pad columns).
    logits = jnp.dot(h.astype(w2_ref.dtype), w2_ref[...],
                     preferred_element_type=jnp.float32) + b2_ref[...]

    if use_softmax:
        # Numerically stable softmax; padded columns carry a -1e30 bias so
        # their exp() is exactly 0 and the denominator is unaffected.
        m = jnp.max(logits, axis=-1, keepdims=True)
        e = jnp.exp(logits - m)
        denom = jnp.sum(e, axis=-1, keepdims=True)
        out = e * pl.reciprocal(denom, approx=True)  # EUP slot, not a divide
    else:
        out = logits

    o_ref[...] = out.astype(o_ref.dtype)


def prepare_params(params, state_dim, compute_dtype=jnp.bfloat16, lane=128):
    """One-time parameter prep (do NOT call per forward pass).

    - Casts weights to bf16.
    - Splits W1 into the previous/next halves (fuses away the torch.cat).
    - Reshapes biases to (1, N) f32 rows.
    - Pads W2/b2 along the action axis to a multiple of 128 lanes; padded b2
      columns get -1e30 so softmax ignores them.
    """
    w1, b1, w2, b2 = params["w1"], params["b1"], params["w2"], params["b2"]
    H = w1.shape[1]
    A = w2.shape[1]
    A_pad = max(lane, pl.cdiv(A, lane) * lane)

    w1c = w1.astype(compute_dtype)
    w2_pad = jnp.zeros((H, A_pad), compute_dtype).at[:, :A].set(
        w2.astype(compute_dtype))
    b2_pad = jnp.full((1, A_pad), _NEG_BIG, jnp.float32).at[:, :A].set(
        b2.reshape(1, A).astype(jnp.float32))

    return {
        "w1_prev": w1c[:state_dim],               # (S, H) bf16
        "w1_next": w1c[state_dim:],               # (S, H) bf16
        "b1": b1.reshape(1, H).astype(jnp.float32),
        "w2": w2_pad,                              # (H, A_pad) bf16
        "b2": b2_pad,                              # (1, A_pad) f32
        "state_dim": state_dim,
        "hidden": H,
        "action_classes": A,
        "action_classes_padded": A_pad,
    }


def _pick_block_b(B, target=512):
    """Largest divisor of B that is <= target and a multiple of 128 (full MXU
    M-tiles), falling back to multiples of 8 (sublane), else the whole batch.
    Small batches run as a single grid step."""
    if B <= target:
        return B
    for step in (128, 8):
        cand = (target // step) * step
        while cand >= step:
            if B % cand == 0:
                return cand
            cand -= step
    return B


def simple_inverse_net(previous_state, next_state, prepared, use_softmax=True,
                       block_b=None):
    """Forward pass matching SimpleinverseNet.forward semantics."""
    B, S = previous_state.shape
    assert next_state.shape == (B, S)
    assert prepared["state_dim"] == S
    H = prepared["hidden"]
    A = prepared["action_classes"]
    A_pad = prepared["action_classes_padded"]

    if block_b is None:
        block_b = _pick_block_b(B)
    if block_b >= B or (B % block_b) or (block_b % 8 and block_b != B):
        block_b = B
    n_blocks = B // block_b

    kernel = functools.partial(_inverse_net_kernel, use_softmax=use_softmax)

    # Advisory cost for XLA scheduling around the custom call.
    flops = 2 * B * (2 * S * H + H * A_pad)
    transcendentals = B * A_pad if use_softmax else 0
    bytes_accessed = (2 * B * S * 4                       # prev + next (f32)
                      + 2 * S * H * 2 + H * 4             # W1 halves + b1
                      + H * A_pad * 2 + A_pad * 4         # W2 + b2
                      + B * A_pad * 4)                     # output (f32)
    cost = pl.CostEstimate(flops=int(flops),
                           transcendentals=int(transcendentals),
                           bytes_accessed=int(bytes_accessed))

    # VMEM budget: double-buffered activation/output tiles + resident weights
    # + f32 intermediates.  Only raise the limit when the default (32 MiB
    # scoped) would not cover it (matters on v5e's 16 MiB / v7x's 64 MiB).
    vmem_est = (2 * (2 * block_b * S * 4)                  # prev/next tiles
                + 2 * (2 * S * H * 2 + H * 4 + H * A_pad * 2 + A_pad * 4)
                + 2 * (block_b * A_pad * 4)                # out tiles
                + block_b * H * 4 + block_b * A_pad * 4)   # h / logits
    compiler_kwargs = {}
    if vmem_est > 32 * 1024 * 1024:
        compiler_kwargs["vmem_limit_bytes"] = int(min(vmem_est * 5 // 4,
                                                      100 * 1024 * 1024))

    out_padded = pl.pallas_call(
        kernel,
        out_shape=jax.ShapeDtypeStruct((B, A_pad), jnp.float32),
        grid_spec=pltpu.PrefetchScalarGridSpec(
            num_scalar_prefetch=0,
            grid=(n_blocks,),
            in_specs=[
                pl.BlockSpec((block_b, S), lambda i: (i, 0)),      # prev
                pl.BlockSpec((block_b, S), lambda i: (i, 0)),      # next
                pl.BlockSpec((S, H), lambda i: (0, 0)),            # W1[:S]
                pl.BlockSpec((S, H), lambda i: (0, 0)),            # W1[S:]
                pl.BlockSpec((1, H), lambda i: (0, 0)),            # b1 row
                pl.BlockSpec((H, A_pad), lambda i: (0, 0)),        # W2 (padded)
                pl.BlockSpec((1, A_pad), lambda i: (0, 0)),        # b2 (padded)
            ],
            out_specs=pl.BlockSpec((block_b, A_pad), lambda i: (i, 0)),
        ),
        compiler_params=pltpu.CompilerParams(
            dimension_semantics=("parallel",),   # batch blocks -> megacore/v7x
            **compiler_kwargs),
        cost_estimate=cost,
    )(previous_state, next_state,
      prepared["w1_prev"], prepared["w1_next"], prepared["b1"],
      prepared["w2"], prepared["b2"])

    # Drop the lane-padding columns (cheap view-level slice).
    return out_padded[:, :A]


def init_params(key, state_dim, action_classes, hidden):
    """Deterministic init mimicking nn.Linear (uniform(-1/sqrt(fan_in), ...))."""
    k1, k2, k3, k4 = jax.random.split(key, 4)
    fan1 = 2 * state_dim
    fan2 = hidden
    lim1 = 1.0 / jnp.sqrt(fan1)
    lim2 = 1.0 / jnp.sqrt(fan2)
    return {
        "w1": jax.random.uniform(k1, (fan1, hidden), jnp.float32, -lim1, lim1),
        "b1": jax.random.uniform(k2, (hidden,), jnp.float32, -lim1, lim1),
        "w2": jax.random.uniform(k3, (hidden, action_classes), jnp.float32, -lim2, lim2),
        "b2": jax.random.uniform(k4, (action_classes,), jnp.float32, -lim2, lim2),
    }


def _reference(previous_state, next_state, params):
    x = jnp.concatenate([previous_state, next_state], axis=1)
    h = jnp.maximum(x @ params["w1"] + params["b1"], 0.0)
    logits = h @ params["w2"] + params["b2"]
    return jax.nn.softmax(logits, axis=1)


if __name__ == "__main__":
    batch = 2
    state_dim = 16
    hidden = 32
    action_classes = 8

    key = jax.random.PRNGKey(0)
    kp, kn, kw = jax.random.split(key, 3)
    previous_state = jax.random.normal(kp, (batch, state_dim), jnp.float32)
    next_state = jax.random.normal(kn, (batch, state_dim), jnp.float32)
    params = init_params(kw, state_dim, action_classes, hidden)

    # One-time param prep (bf16 cast, W1 split, bias rows, lane-dense padding).
    prepared = prepare_params(params, state_dim)

    out = simple_inverse_net(previous_state, next_state, prepared)
    out = jax.block_until_ready(out)

    ref = _reference(previous_state, next_state, params)
    assert out.shape == (batch, action_classes)
    # bf16 MXU inputs + approx reciprocal -> relaxed tolerance.
    assert jnp.allclose(out, ref, atol=2e-2, rtol=2e-2), float(jnp.max(jnp.abs(out - ref)))
    assert jnp.allclose(jnp.sum(out, axis=1), 1.0, atol=5e-3)

    print("KERNEL_OK")
</pallas_src>

<mosaic_0001>
module attributes {stable_mosaic.version = 11 : i64} {
  func.func @_inverse_net_kernel(%arg0: i32, %arg1: memref<2x16xf32, #tpu.memory_space<vmem>>, %arg2: memref<2x16xf32, #tpu.memory_space<vmem>>, %arg3: memref<16x32xbf16, #tpu.memory_space<vmem>>, %arg4: memref<16x32xbf16, #tpu.memory_space<vmem>>, %arg5: memref<1x32xf32, #tpu.memory_space<vmem>>, %arg6: memref<32x128xbf16, #tpu.memory_space<vmem>>, %arg7: memref<1x128xf32, #tpu.memory_space<vmem>>, %arg8: memref<2x128xf32, #tpu.memory_space<vmem>>) attributes {dimension_semantics = [#tpu.dimension_semantics<parallel>], iteration_bounds = array<i64: 1>, scalar_prefetch = 0 : i64, scratch_operands = 0 : i64, tpu.core_type = #tpu.core_type<tc>, window_params = [{transform_indices = @transform_0, window_bounds = array<i64: 2, 16>}, {transform_indices = @transform_1, window_bounds = array<i64: 2, 16>}, {pipeline_mode = #tpu.pipeline_mode<synchronous>, transform_indices = @transform_2, window_bounds = array<i64: 16, 32>}, {pipeline_mode = #tpu.pipeline_mode<synchronous>, transform_indices = @transform_3, window_bounds = array<i64: 16, 32>}, {pipeline_mode = #tpu.pipeline_mode<synchronous>, transform_indices = @transform_4, window_bounds = array<i64: 1, 32>}, {pipeline_mode = #tpu.pipeline_mode<synchronous>, transform_indices = @transform_5, window_bounds = array<i64: 32, 128>}, {pipeline_mode = #tpu.pipeline_mode<synchronous>, transform_indices = @transform_6, window_bounds = array<i64: 1, 128>}, {transform_indices = @transform_7, window_bounds = array<i64: 2, 128>}]} {
    %c0 = arith.constant 0 : index
    %c0_0 = arith.constant 0 : index
    %0 = vector.load %arg1[%c0, %c0_0] : memref<2x16xf32, #tpu.memory_space<vmem>>, vector<2x16xf32>
    %1 = arith.truncf %0 : vector<2x16xf32> to vector<2x16xbf16>
    %c0_1 = arith.constant 0 : index
    %c0_2 = arith.constant 0 : index
    %2 = vector.load %arg3[%c0_1, %c0_2] : memref<16x32xbf16, #tpu.memory_space<vmem>>, vector<16x32xbf16>
    %cst = arith.constant dense<0.000000e+00> : vector<2x32xf32>
    %3 = tpu.matmul %1, %2, %cst {dimension_numbers = #tpu.dot_dimension_numbers<[1], [0], [0], [1], [0, 0, 1, 1], [], []>} : vector<2x16xbf16>, vector<16x32xbf16>, vector<2x32xf32> -> vector<2x32xf32>
    %c0_3 = arith.constant 0 : index
    %c0_4 = arith.constant 0 : index
    %4 = vector.load %arg2[%c0_3, %c0_4] : memref<2x16xf32, #tpu.memory_space<vmem>>, vector<2x16xf32>
    %5 = arith.truncf %4 : vector<2x16xf32> to vector<2x16xbf16>
    %c0_5 = arith.constant 0 : index
    %c0_6 = arith.constant 0 : index
    %6 = vector.load %arg4[%c0_5, %c0_6] : memref<16x32xbf16, #tpu.memory_space<vmem>>, vector<16x32xbf16>
    %cst_7 = arith.constant dense<0.000000e+00> : vector<2x32xf32>
    %7 = tpu.matmul %5, %6, %cst_7 {dimension_numbers = #tpu.dot_dimension_numbers<[1], [0], [0], [1], [0, 0, 1, 1], [], []>} : vector<2x16xbf16>, vector<16x32xbf16>, vector<2x32xf32> -> vector<2x32xf32>
    %8 = arith.addf %3, %7 : vector<2x32xf32>
    %c0_8 = arith.constant 0 : index
    %c0_9 = arith.constant 0 : index
    %9 = vector.load %arg5[%c0_8, %c0_9] : memref<1x32xf32, #tpu.memory_space<vmem>>, vector<1x32xf32>
    %10 = vector.broadcast %9 : vector<1x32xf32> to vector<2x32xf32>
    %11 = arith.addf %8, %10 : vector<2x32xf32>
    %cst_10 = arith.constant 0.000000e+00 : f32
    %12 = vector.broadcast %cst_10 : f32 to vector<2x32xf32>
    %13 = arith.maximumf %11, %12 : vector<2x32xf32>
    %14 = arith.truncf %13 : vector<2x32xf32> to vector<2x32xbf16>
    %c0_11 = arith.constant 0 : index
    %c0_12 = arith.constant 0 : index
    %15 = vector.load %arg6[%c0_11, %c0_12] : memref<32x128xbf16, #tpu.memory_space<vmem>>, vector<32x128xbf16>
    %cst_13 = arith.constant dense<0.000000e+00> : vector<2x128xf32>
    %16 = tpu.matmul %14, %15, %cst_13 {dimension_numbers = #tpu.dot_dimension_numbers<[1], [0], [0], [1], [0, 0, 1, 1], [], []>} : vector<2x32xbf16>, vector<32x128xbf16>, vector<2x128xf32> -> vector<2x128xf32>
    %c0_14 = arith.constant 0 : index
    %c0_15 = arith.constant 0 : index
    %17 = vector.load %arg7[%c0_14, %c0_15] : memref<1x128xf32, #tpu.memory_space<vmem>>, vector<1x128xf32>
    %18 = vector.broadcast %17 : vector<1x128xf32> to vector<2x128xf32>
    %19 = arith.addf %16, %18 : vector<2x128xf32>
    %cst_16 = arith.constant dense<0xFF800000> : vector<2xf32>
    %20 = vector.multi_reduction <maximumf>, %19, %cst_16 [1] : vector<2x128xf32> to vector<2xf32>
    %21 = vector.shape_cast %20 : vector<2xf32> to vector<2x1xf32>
    %22 = vector.broadcast %21 : vector<2x1xf32> to vector<2x128xf32>
    %23 = arith.subf %19, %22 : vector<2x128xf32>
    %24 = math.exp %23 : vector<2x128xf32>
    %cst_17 = arith.constant dense<0.000000e+00> : vector<2xf32>
    %25 = vector.multi_reduction <add>, %24, %cst_17 [1] : vector<2x128xf32> to vector<2xf32>
    %26 = vector.shape_cast %25 : vector<2xf32> to vector<2x1xf32>
    %27 = tpu.reciprocal %26 {approx = true} : vector<2x1xf32> -> vector<2x1xf32>
    %28 = vector.broadcast %27 : vector<2x1xf32> to vector<2x128xf32>
    %29 = arith.mulf %24, %28 : vector<2x128xf32>
    %c0_18 = arith.constant 0 : index
    %c0_19 = arith.constant 0 : index
    %30 = vector.load %arg8[%c0_18, %c0_19] : memref<2x128xf32, #tpu.memory_space<vmem>>, vector<2x128xf32>
    tpu.vector_store %arg8[%c0_18, %c0_19], %29 {strides = array<i32>} : memref<2x128xf32, #tpu.memory_space<vmem>>, vector<2x128xf32>,
    return
  }
  func.func @transform_0(%arg0: i32) -> (i32, i32) {
    %c0_i32 = arith.constant 0 : i32
    %c0_i32_0 = arith.constant 0 : i32
    return %arg0, %c0_i32 : i32, i32
  }
  func.func @transform_1(%arg0: i32) -> (i32, i32) {
    %c0_i32 = arith.constant 0 : i32
    %c0_i32_0 = arith.constant 0 : i32
    return %arg0, %c0_i32 : i32, i32
  }
  func.func @transform_2(%arg0: i32) -> (i32, i32) {
    %c0_i32 = arith.constant 0 : i32
    %c0_i32_0 = arith.constant 0 : i32
    %c0_i32_1 = arith.constant 0 : i32
    return %c0_i32, %c0_i32_0 : i32, i32
  }
  func.func @transform_3(%arg0: i32) -> (i32, i32) {
    %c0_i32 = arith.constant 0 : i32
    %c0_i32_0 = arith.constant 0 : i32
    %c0_i32_1 = arith.constant 0 : i32
    return %c0_i32, %c0_i32_0 : i32, i32
  }
  func.func @transform_4(%arg0: i32) -> (i32, i32) {
    %c0_i32 = arith.constant 0 : i32
    %c0_i32_0 = arith.constant 0 : i32
    %c0_i32_1 = arith.constant 0 : i32
    return %c0_i32, %c0_i32_0 : i32, i32
  }
  func.func @transform_5(%arg0: i32) -> (i32, i32) {
    %c0_i32 = arith.constant 0 : i32
    %c0_i32_0 = arith.constant 0 : i32
    %c0_i32_1 = arith.constant 0 : i32
    return %c0_i32, %c0_i32_0 : i32, i32
  }
  func.func @transform_6(%arg0: i32) -> (i32, i32) {
    %c0_i32 = arith.constant 0 : i32
    %c0_i32_0 = arith.constant 0 : i32
    %c0_i32_1 = arith.constant 0 : i32
    return %c0_i32, %c0_i32_0 : i32, i32
  }
  func.func @transform_7(%arg0: i32) -> (i32, i32) {
    %c0_i32 = arith.constant 0 : i32
    %c0_i32_0 = arith.constant 0 : i32
    return %arg0, %c0_i32 : i32, i32
  }
}

</mosaic_0001>

<llo_original>
// kernel: tpu_custom_call.1
$region0: #{tpu_custom_call.1}
  #allocation0 [shape = 'u32[]', space=smem, size = 0x4, offset = 0x4, fixed_abs, tag = 'smem constant byte address 0x4 - core index']
  #allocation1 [shape = 'u32[144,128]{1,0:T(1,128)}', space=vmem, size = 0x12000, scoped, tag = 'internal scratch']
  %s0 = inlined_call_operand.hbm [shape: f32[2,16], index: 0, kind: input, shape index: {}]
  %s1 = inlined_call_operand.vmem [shape: f32[2,16], index: 1, kind: input, shape index: {}]
  %s2 = inlined_call_operand.hbm [shape: bf16[16,32], index: 2, kind: input, shape index: {}]
  %s3 = inlined_call_operand.hbm [shape: bf16[16,32], index: 3, kind: input, shape index: {}]
  %s4 = inlined_call_operand.hbm [shape: f32[1,32], index: 4, kind: input, shape index: {}]
  %s5 = inlined_call_operand.vmem [shape: bf16[32,128], index: 5, kind: input, shape index: {}]
  %s6 = inlined_call_operand.vmem [shape: f32[1,128], index: 6, kind: input, shape index: {}]
  %s7 = inlined_call_operand.hbm [shape: f32[2,128], index: 7, kind: output, shape index: {}]
  %s8 = sld [smem:[#allocation0]]
  $region54: #{tpu_custom_call.1} parent=0
    _
  %s10 = ssub.s32 1, %s8
  %s11 = scalar_select 0, %s10, %s8
  $region1: #{tpu_custom_call.1} parent=0
    #allocation2 [shape = 'u8[1024]{0}', space=vmem, size = 0x400, scoped, tag = 'input window, operand 0, single buffered']
    #allocation3 [shape = 's32[1]{0}', space=sflag, size = 0x4, scoped, tag = 'scoped memory for tpu_custom_call.1']
    #allocation4 [shape = 's32[1]{0}', space=sflag, size = 0x4, scoped, tag = 'scoped memory for tpu_custom_call.1']
    #allocation5 [shape = 'u8[4096]{0}', space=vmem, size = 0x1000, scoped, tag = 'input window, operand 2, single buffered']
    #allocation6 [shape = 's32[1]{0}', space=sflag, size = 0x4, scoped, tag = 'scoped memory for tpu_custom_call.1']
    #allocation7 [shape = 'u8[4096]{0}', space=vmem, size = 0x1000, scoped, tag = 'input window, operand 3, single buffered']
    #allocation8 [shape = 'u8[512]{0}', space=vmem, size = 0x400, scoped, tag = 'input window, operand 4, single buffered']
    #allocation9 [shape = 's32[1]{0}', space=sflag, size = 0x4, scoped, tag = 'scoped memory for tpu_custom_call.1']
    #allocation10 [shape = 'u8[1024]{0}', space=vmem, size = 0x400, scoped, tag = 'output window, operand 0, single buffered']
    %12 = vsyncpa [#allocation3], 0
    %13 = vsyncpa [#allocation6], 0
    %14 = vsyncpa [#allocation9], 0
    %15 = vsyncpa [#allocation4], 0
    // Predicated region
    $region2: #{tpu_custom_call.1} parent=1 // pred_check
      _
    $region3: #{tpu_custom_call.1} parent=1 // pred_check_branch
      %17 = sbr.rel (0) target = $region5
    $region4: #{tpu_custom_call.1} parent=1 // pred_region
      %s19 = ssub.s32 32, 32
      %20 = vsyncadd [#allocation3], %s19
      %s22 = sshll.u32 [#allocation2], 4
      %s23 = int_to_ptr.vmem [resolvable:$true] %s22
      %25 = dma.hbm_to_vmem [thread:$0]  %s0, 32, %s23, [#allocation3]
    $region5: #{tpu_custom_call.1} parent=1 // pred_fallthru
      _
    // Predicated region
    $region6: #{tpu_custom_call.1} parent=1 // pred_check
      _
    $region7: #{tpu_custom_call.1} parent=1 // pred_check_branch
      %27 = sbr.rel (0) target = $region9
    $region8: #{tpu_custom_call.1} parent=1 // pred_region
      _
    $region9: #{tpu_custom_call.1} parent=1 // pred_fallthru
      _
    // Predicated region
    $region10: #{tpu_custom_call.1} parent=1 // pred_check
      _
    $region11: #{tpu_custom_call.1} parent=1 // pred_check_branch
      %29 = sbr.rel (0) target = $region13
    $region12: #{tpu_custom_call.1} parent=1 // pred_region
      %s31 = ssub.s32 128, 128
      %32 = vsyncadd [#allocation6], %s31
      %s33 = sshll.u32 [#allocation5], 4
      %s34 = int_to_ptr.vmem [resolvable:$true] %s33
      %39 = dma.hbm_to_vmem [thread:$0]  %s2, 128, %s34, [#allocation6], 64, 64, 4
    $region13: #{tpu_custom_call.1} parent=1 // pred_fallthru
      _
    // Predicated region
    $region14: #{tpu_custom_call.1} parent=1 // pred_check
      _
    $region15: #{tpu_custom_call.1} parent=1 // pred_check_branch
      %41 = sbr.rel (0) target = $region17
    $region16: #{tpu_custom_call.1} parent=1 // pred_region
      %s43 = ssub.s32 128, 128
      %44 = vsyncadd [#allocation6], %s43
      %s45 = sshll.u32 [#allocation7], 4
      %s46 = int_to_ptr.vmem [resolvable:$true] %s45
      %51 = dma.hbm_to_vmem [thread:$0]  %s3, 128, %s46, [#allocation6], 64, 64, 4
    $region17: #{tpu_custom_call.1} parent=1 // pred_fallthru
      _
    // Predicated region
    $region18: #{tpu_custom_call.1} parent=1 // pred_check
      _
    $region19: #{tpu_custom_call.1} parent=1 // pred_check_branch
      %53 = sbr.rel (0) target = $region21
    $region20: #{tpu_custom_call.1} parent=1 // pred_region
      %s55 = ssub.s32 16, 16
      %56 = vsyncadd [#allocation9], %s55
      %s58 = sshll.u32 [#allocation8], 4
      %s59 = int_to_ptr.vmem [resolvable:$true] %s58
      %61 = dma.hbm_to_vmem [thread:$0]  %s4, 16, %s59, [#allocation9]
    $region21: #{tpu_custom_call.1} parent=1 // pred_fallthru
      _
    // Predicated region
    $region22: #{tpu_custom_call.1} parent=1 // pred_check
      _
    $region23: #{tpu_custom_call.1} parent=1 // pred_check_branch
      %63 = sbr.rel (0) target = $region25
    $region24: #{tpu_custom_call.1} parent=1 // pred_region
      _
    $region25: #{tpu_custom_call.1} parent=1 // pred_fallthru
      _
    // Predicated region
    $region26: #{tpu_custom_call.1} parent=1 // pred_check
      _
    $region27: #{tpu_custom_call.1} parent=1 // pred_check_branch
      %65 = sbr.rel (0) target = $region29
    $region28: #{tpu_custom_call.1} parent=1 // pred_region
      _
    $region29: #{tpu_custom_call.1} parent=1 // pred_fallthru
      _
    // Predicated region
    $region30: #{tpu_custom_call.1} parent=1 // pred_check
      _
    $region31: #{tpu_custom_call.1} parent=1 // pred_check_branch
      %67 = sbr.rel (0) target = $region33
    $region32: #{tpu_custom_call.1} parent=1 // pred_region
      %68 = dma.done [#allocation3], 32
    $region33: #{tpu_custom_call.1} parent=1 // pred_fallthru
      _
    // Predicated region
    $region34: #{tpu_custom_call.1} parent=1 // pred_check
      _
    $region35: #{tpu_custom_call.1} parent=1 // pred_check_branch
      %70 = sbr.rel (0) target = $region37
    $region36: #{tpu_custom_call.1} parent=1 // pred_region
      %71 = dma.done [#allocation6], 128
    $region37: #{tpu_custom_call.1} parent=1 // pred_fallthru
      _
    // Predicated region
    $region38: #{tpu_custom_call.1} parent=1 // pred_check
      _
    $region39: #{tpu_custom_call.1} parent=1 // pred_check_branch
      %73 = sbr.rel (0) target = $region41
    $region40: #{tpu_custom_call.1} parent=1 // pred_region
      %74 = dma.done [#allocation6], 128
    $region41: #{tpu_custom_call.1} parent=1 // pred_fallthru
      _
    // Predicated region
    $region42: #{tpu_custom_call.1} parent=1 // pred_check
      _
    $region43: #{tpu_custom_call.1} parent=1 // pred_check_branch
      %76 = sbr.rel (0) target = $region45
    $region44: #{tpu_custom_call.1} parent=1 // pred_region
      %77 = dma.done [#allocation9], 16
    $region45: #{tpu_custom_call.1} parent=1 // pred_fallthru
      _
    %v79 = vld [vmem:[#allocation2] sm:$0x3]
    %v80 = vpack.c.bf16 %v79, %v79
    %v81 = vld [vmem:[#allocation5] sm:$0xf]
    %v82 = vld [vmem:[#allocation5 + $0x4] sm:$0xf]
    %v83 = vld [vmem:[%s1] sm:$0x3]
    %v84 = vpack.c.bf16 %v83, %v83
    %v85 = vld [vmem:[#allocation7] sm:$0xf]
    %v86 = vld [vmem:[#allocation7 + $0x4] sm:$0xf]
    %v89 = vunpack.c.l.b16 %v85
    %v90 = vunpack.c.l.b16 %v86
    %v91 = vpack.c.b16 %v90, %v89
    %vm93 = vcmask 130048
    %v95 = vsel %vm93, %v84, 0
    %97 = vmatprep.subr.bf16.mxu0 0
    %98 = vmatpush1.bf16.msra.mxu0 %v91
    %99 = vmatprep.subr.bf16.mxu0 0
    %100 = vmatpush1.bf16.msra.mxu0 0
    %101 = vmatprep.subr.bf16.mxu0 0
    %102 = vmatpush1.bf16.msra.mxu0 0
    %103 = vmatprep.subr.bf16.mxu0 0
    %104 = vmatpush1.bf16.msra.mxu0 0
    %105 = vmatprep.subr.bf16.mxu0 0
    %106 = vmatpush1.bf16.msra.mxu0 0
    %107 = vmatprep.subr.bf16.mxu0 0
    %108 = vmatpush1.bf16.msra.mxu0 0
    %109 = vmatprep.subr.bf16.mxu0 0
    %110 = vmatpush1.bf16.msra.mxu0 0
    %111 = vmatprep.subr.bf16.mxu0 0
    %112 = vmatpush1.bf16.msra.mxu0 0
    %113 = vmatprep.subr.bf16.mxu0 0
    %114 = vmatpush1.bf16.msra.mxu0 0
    %115 = vmatprep.subr.bf16.mxu0 0
    %116 = vmatpush1.bf16.msra.mxu0 0
    %117 = vmatprep.subr.bf16.mxu0 0
    %118 = vmatpush1.bf16.msra.mxu0 0
    %119 = vmatprep.subr.bf16.mxu0 0
    %120 = vmatpush1.bf16.msra.mxu0 0
    %121 = vmatprep.subr.bf16.mxu0 0
    %122 = vmatpush1.bf16.msra.mxu0 0
    %123 = vmatprep.subr.bf16.mxu0 0
    %124 = vmatpush1.bf16.msra.mxu0 0
    %125 = vmatprep.subr.bf16.mxu0 0
    %126 = vmatpush1.bf16.msra.mxu0 0
    %127 = vmatprep.subr.bf16.mxu0 0
    %128 = vmatpush1.bf16.msra.mxu0 0
    %129 = vmatprep.mubr.bf16.mxu0 0
    %130 = vmatmul.mubr.bf16.gmra.mrb[0].mxu0 %v95
    %v131 = vpop.f32.mrb[0].mxu0
    %v132 = vadd.f32 0.0, %v131
    %v133 = vpop.f32.mrb[0].mxu0
    %v134 = vpop.f32.mrb[0].mxu0
    %v135 = vpop.f32.mrb[0].mxu0
    %136 = vdwg.mxu0
    %v139 = vunpack.c.l.b16 %v81
    %v140 = vunpack.c.l.b16 %v82
    %v141 = vpack.c.b16 %v140, %v139
    %v144 = vsel %vm93, %v80, 0
    %146 = vmatprep.subr.bf16.mxu0 0
    %147 = vmatpush1.bf16.msra.mxu0 %v141
    %148 = vmatprep.subr.bf16.mxu0 0
    %149 = vmatpush1.bf16.msra.mxu0 0
    %150 = vmatprep.subr.bf16.mxu0 0
    %151 = vmatpush1.bf16.msra.mxu0 0
    %152 = vmatprep.subr.bf16.mxu0 0
    %153 = vmatpush1.bf16.msra.mxu0 0
    %154 = vmatprep.subr.bf16.mxu0 0
    %155 = vmatpush1.bf16.msra.mxu0 0
    %156 = vmatprep.subr.bf16.mxu0 0
    %157 = vmatpush1.bf16.msra.mxu0 0
    %158 = vmatprep.subr.bf16.mxu0 0
    %159 = vmatpush1.bf16.msra.mxu0 0
    %160 = vmatprep.subr.bf16.mxu0 0
    %161 = vmatpush1.bf16.msra.mxu0 0
    %162 = vmatprep.subr.bf16.mxu0 0
    %163 = vmatpush1.bf16.msra.mxu0 0
    %164 = vmatprep.subr.bf16.mxu0 0
    %165 = vmatpush1.bf16.msra.mxu0 0
    %166 = vmatprep.subr.bf16.mxu0 0
    %167 = vmatpush1.bf16.msra.mxu0 0
    %168 = vmatprep.subr.bf16.mxu0 0
    %169 = vmatpush1.bf16.msra.mxu0 0
    %170 = vmatprep.subr.bf16.mxu0 0
    %171 = vmatpush1.bf16.msra.mxu0 0
    %172 = vmatprep.subr.bf16.mxu0 0
    %173 = vmatpush1.bf16.msra.mxu0 0
    %174 = vmatprep.subr.bf16.mxu0 0
    %175 = vmatpush1.bf16.msra.mxu0 0
    %176 = vmatprep.subr.bf16.mxu0 0
    %177 = vmatpush1.bf16.msra.mxu0 0
    %178 = vmatprep.mubr.bf16.mxu0 0
    %179 = vmatmul.mubr.bf16.gmra.mrb[0].mxu0 %v144
    %v180 = vpop.f32.mrb[0].mxu0
    %v181 = vadd.f32 %v132, %v180
    %v182 = vpop.f32.mrb[0].mxu0
    %v183 = vpop.f32.mrb[0].mxu0
    %v184 = vpop.f32.mrb[0].mxu0
    %185 = vdwg.mxu0
    %v186 = vld [vmem:[#allocation8] sm:$0x1]
    %v188 = vlaneseq
    %v189 = vshrl.u32 %v188, 7
    %v190 = vsub.s32 0, %v189
    %v191 = vrot.slane %v186, %v190
    %v193 = vadd.f32 %v181, %v191
    %v194 = vmax.f32 %v193, 0.0
    %v195 = vpack.c.bf16 %v194, %v194
    %v196 = vld [vmem:[%s5] sm:$0xf]
    %v197 = vld [vmem:[%s5 + $0x4] sm:$0xf]
    %v198 = vld [vmem:[%s5 + $0x8] sm:$0xf]
    %v199 = vld [vmem:[%s5 + $0xc] sm:$0xf]
    %v200 = vld [vmem:[%s6] sm:$0x1]
    %v202 = vlaneseq
    %v203 = vshrl.u32 %v202, 7
    %v204 = vsub.s32 0, %v203
    %v205 = vrot.slane %v200, %v204
    %v211 = vunpack.c.l.b16 %v196
    %v212 = vunpack.c.l.b16 %v197
    %v213 = vunpack.c.l.b16 %v198
    %v214 = vunpack.c.l.b16 %v199
    %v215 = vpack.c.b16 %v212, %v211
    %v216 = vpack.c.b16 %v214, %v213
    %vm219 = vcmask 261120
    %v221 = vsel %vm219, %v195, 0
    %223 = vmatprep.subr.bf16.mxu0 0
    %224 = vmatpush1.bf16.msra.mxu0 %v215
    %225 = vmatprep.subr.bf16.mxu0 0
    %226 = vmatpush1.bf16.msra.mxu0 %v216
    %227 = vmatprep.subr.bf16.mxu0 0
    %228 = vmatpush1.bf16.msra.mxu0 0
    %229 = vmatprep.subr.bf16.mxu0 0
    %230 = vmatpush1.bf16.msra.mxu0 0
    %231 = vmatprep.subr.bf16.mxu0 0
    %232 = vmatpush1.bf16.msra.mxu0 0
    %233 = vmatprep.subr.bf16.mxu0 0
    %234 = vmatpush1.bf16.msra.mxu0 0
    %235 = vmatprep.subr.bf16.mxu0 0
    %236 = vmatpush1.bf16.msra.mxu0 0
    %237 = vmatprep.subr.bf16.mxu0 0
    %238 = vmatpush1.bf16.msra.mxu0 0
    %239 = vmatprep.subr.bf16.mxu0 0
    %240 = vmatpush1.bf16.msra.mxu0 0
    %241 = vmatprep.subr.bf16.mxu0 0
    %242 = vmatpush1.bf16.msra.mxu0 0
    %243 = vmatprep.subr.bf16.mxu0 0
    %244 = vmatpush1.bf16.msra.mxu0 0
    %245 = vmatprep.subr.bf16.mxu0 0
    %246 = vmatpush1.bf16.msra.mxu0 0
    %247 = vmatprep.subr.bf16.mxu0 0
    %248 = vmatpush1.bf16.msra.mxu0 0
    %249 = vmatprep.subr.bf16.mxu0 0
    %250 = vmatpush1.bf16.msra.mxu0 0
    %251 = vmatprep.subr.bf16.mxu0 0
    %252 = vmatpush1.bf16.msra.mxu0 0
    %253 = vmatprep.subr.bf16.mxu0 0
    %254 = vmatpush1.bf16.msra.mxu0 0
    %255 = vmatprep.mubr.bf16.mxu0 0
    %256 = vmatmul.mubr.bf16.gmra.mrb[0].mxu0 %v221
    %v257 = vpop.f32.mrb[0].mxu0
    %v258 = vadd.f32 %v205, %v257
    %v259 = vpop.f32.mrb[0].mxu0
    %v260 = vpop.f32.mrb[0].mxu0
    %v261 = vpop.f32.mrb[0].mxu0
    %262 = vdwg.mxu0
    %vm263 = vcmask 1041408
    %v264 = vsel %vm263, %v258, -inf
    %265 = vmax.xlane.f32.xlu0 %v264
    %v266 = vpop.xlane.xlu0 %265
    %v267 = vsub.f32 %v258, %v266
    %v268 = vmul.f32 %v267, 1.442695
    %v269 = vpow.pop %v268
    %v270 = vsel %vm263, %v269, 0.0
    %271 = vadd.xlane.f32.xlu0 %v270
    %v272 = vpop.xlane.xlu0 %271
    %v273 = vrcp.pop %v272
    %v274 = vmul.f32 %v269, %v273
    %275 = vst [vmem:[#allocation10] sm:$0x3] %v274
    // Predicated region
    $region46: #{tpu_custom_call.1} parent=1 // pred_check
      _
    $region47: #{tpu_custom_call.1} parent=1 // pred_check_branch
      %277 = sbr.rel (0) target = $region49
    $region48: #{tpu_custom_call.1} parent=1 // pred_region
      %s279 = ssub.s32 32, 32
      %280 = vsyncadd [#allocation4], %s279
      %s282 = sshll.u32 [#allocation10], 4
      %s283 = int_to_ptr.vmem [resolvable:$true] %s282
      %285 = dma.vmem_to_hbm [thread:$0]  %s283, 32, %s7, [#allocation4]
    $region49: #{tpu_custom_call.1} parent=1 // pred_fallthru
      _
    // Predicated region
    $region50: #{tpu_custom_call.1} parent=1 // pred_check
      _
    $region51: #{tpu_custom_call.1} parent=1 // pred_check_branch
      %287 = sbr.rel (0) target = $region53
    $region52: #{tpu_custom_call.1} parent=1 // pred_region
      %288 = dma.done [#allocation4], 32
    $region53: #{tpu_custom_call.1} parent=1 // pred_fallthru
      _
    %289 = vsyncpa [#allocation3], 1
    %290 = vsyncpa [#allocation6], 1
    %291 = vsyncpa [#allocation9], 1
    %292 = vsyncpa [#allocation4], 1

</llo_original>
